<compile_context>
chip_gen: v7x
topology: tpu7x:2x2x1
jax: 0.10.0
libtpu: 0.0.40
codegen_flags: <defaults>
</compile_context>

<pallas_src>
import functools
import math

import jax
import jax.numpy as jnp
import numpy as np
from jax.experimental import pallas as pl
from jax.experimental.pallas import tpu as pltpu


def _psnr_partial_kernel(x_ref, y_ref, o_ref, acc_ref, *,
                         l_tile, l_true, num_tiles, tiles_per_shard, need_mask):
    """Accumulate sum((clip(x)-clip(y))^2) over the lane axis per row.

    x_ref, y_ref: (rows, l_tile) input tiles.  o_ref: (rows, 1) per-shard
    partial sum (written once in the finalize step).  acc_ref: (rows, 1) VMEM
    scratch accumulator.
    """
    l = pl.program_id(1)

    @pl.when(l == 0)
    def _():
        acc_ref[...] = jnp.zeros_like(acc_ref)

    xv = x_ref[...].astype(jnp.float32)
    yv = y_ref[...].astype(jnp.float32)
    d = jnp.clip(xv, 0.0, 1.0) - jnp.clip(yv, 0.0, 1.0)
    sq = d * d

    if need_mask:
        tile_idx = pl.program_id(0) * tiles_per_shard + l

        # Interior tiles: plain accumulate, no per-element mask ops.
        @pl.when(tile_idx < num_tiles - 1)
        def _():
            acc_ref[...] += jnp.sum(sq, axis=-1, keepdims=True)

        # The single true tail tile: mask lanes past the real length.
        # NOTE: the tail block's out-of-range lanes hold unspecified data;
        # correctness relies on jnp.where *selecting* 0 for them (do not turn
        # this into a multiply-by-mask in a future refactor).
        # Fully padded shard tiles (tile_idx >= num_tiles, clamped onto the
        # last real tile by the index_map) fall through both branches and
        # never touch the accumulator.
        @pl.when(tile_idx == num_tiles - 1)
        def _():
            col = (num_tiles - 1) * l_tile + jax.lax.broadcasted_iota(
                jnp.int32, sq.shape, 1)
            acc_ref[...] += jnp.sum(jnp.where(col < l_true, sq, 0.0),
                                    axis=-1, keepdims=True)
    else:
        acc_ref[...] += jnp.sum(sq, axis=-1, keepdims=True)

    @pl.when(l == pl.num_programs(1) - 1)
    def _():
        o_ref[...] = acc_ref[...]


def _tpu_vmem_and_cores():
    """(physical VMEM bytes, TensorCore count) with conservative fallbacks."""
    vmem_bytes = 64 * 1024 * 1024   # conservative default (v7x per-TC)
    num_cores = 1                   # v5e / v6e are single-core
    try:
        info = pltpu.get_tpu_info()
        cap = getattr(info, "vmem_capacity_bytes", None)
        if isinstance(cap, (int, np.integer)) and int(cap) > 0:
            vmem_bytes = int(cap)
        for attr in ("num_tensorcores", "tensorcore_count", "num_cores",
                     "core_count", "num_tensor_cores"):
            v = getattr(info, attr, None)
            if isinstance(v, (int, np.integer)) and int(v) > 0:
                num_cores = int(v)
                break
    except Exception:
        pass
    return vmem_bytes, num_cores


def _fold_rows(rows, length):
    """Spatial factor k folded into the row axis so (rows*k) % 8 == 0."""
    k = 8 // math.gcd(rows, 8)
    if k > 1 and length % k == 0:
        return k
    return 1


def _choose_l_tile(rows, length, itemsize, vmem_budget_bytes,
                   target_block_bytes=4 * 1024 * 1024):
    """Lane-tile width: ~4 MiB per input block, capped by the VMEM budget."""
    # Per lane column: 2 inputs x 2 pipeline buffers at native width, plus
    # ~3 f32 compute temporaries (xv, yv, sq) that are not double-buffered.
    per_lane = rows * (2 * 2 * itemsize + 3 * 4)
    budget_tile = max(128, (vmem_budget_bytes // per_lane) // 128 * 128)
    # ~4 MiB/input/step amortizes the ~0.35 us per-step pipeline overhead to
    # a few percent of the HBM time on all generations.
    target_tile = max(128, (target_block_bytes // (rows * itemsize)) // 128 * 128)
    cap = min(budget_tile, target_tile)
    if length <= cap:
        # Whole row fits in one block: use the full dim (exempt from the
        # 128-divisibility rule) and skip tail masking entirely.
        return length
    return cap


def psnr_rgb(x, y, maxv=1.0, *, l_tile=None, vmem_budget_bytes=None,
             num_shards=None):
    """PSNR per (image, channel).  x, y: (N, 3, H, W) -> (N, 3) float32."""
    assert x.ndim == 4 and x.shape[1] == 3
    assert y.ndim == 4 and y.shape[1] == 3
    assert x.shape == y.shape
    N, C, H, W = x.shape
    R, L = N * C, H * W

    # Per-generation VMEM budget: ~96 MiB on 128-MiB parts, ~48 MiB on v7x.
    vmem_bytes, num_cores = _tpu_vmem_and_cores()
    vmem_limit = int(min(96 * 1024 * 1024, (3 * vmem_bytes) // 4))
    if vmem_budget_bytes is None:
        vmem_budget_bytes = max(8 * 1024 * 1024, vmem_limit - 8 * 1024 * 1024)

    # Sublane-dense packing: fold a spatial factor into the row axis so the
    # second-to-last dim is a multiple of 8 (dense vreg sublanes).
    k = _fold_rows(R, L)
    rows, length = R * k, L // k

    itemsize = max(jnp.dtype(x.dtype).itemsize, jnp.dtype(y.dtype).itemsize)
    if l_tile is None:
        l_tile = _choose_l_tile(rows, length, itemsize, vmem_budget_bytes)
    assert l_tile == length or l_tile % 128 == 0, \
        "l_tile must be the full (folded) row length or a multiple of 128"

    num_tiles = pl.cdiv(length, l_tile)
    if num_shards is None:
        # One shard per TensorCore; single-core chips get no padded shard.
        num_shards = max(1, min(num_cores, num_tiles))
    tiles_per_shard = pl.cdiv(num_tiles, num_shards)
    padded_tiles = num_shards * tiles_per_shard
    need_mask = padded_tiles * l_tile > length

    c1 = float(np.log(255.0 / maxv))
    c2 = float(20.0 / np.log(10.0))
    log255 = float(np.log(255.0))

    # Trivial contiguous collapse; inputs keep their native dtype (the f32
    # cast happens inside the kernel so bf16/uint8 stream at native width).
    x2 = x.reshape(rows, length)
    y2 = y.reshape(rows, length)

    kernel = functools.partial(
        _psnr_partial_kernel,
        l_tile=l_tile, l_true=length, num_tiles=num_tiles,
        tiles_per_shard=tiles_per_shard, need_mask=need_mask)

    if padded_tiles == num_tiles:
        def in_map(p, l):
            return (0, p * tiles_per_shard + l)
    else:
        def in_map(p, l):
            # Clamp padded shard-tiles onto the last real tile; they never
            # touch the accumulator inside the kernel.
            return (0, jnp.minimum(p * tiles_per_shard + l, num_tiles - 1))

    partial = pl.pallas_call(
        kernel,
        out_shape=jax.ShapeDtypeStruct((num_shards, rows, 1), jnp.float32),
        grid_spec=pltpu.PrefetchScalarGridSpec(
            num_scalar_prefetch=0,
            grid=(num_shards, tiles_per_shard),
            in_specs=[
                pl.BlockSpec((rows, l_tile), in_map),
                pl.BlockSpec((rows, l_tile), in_map),
            ],
            # Same block revisited across the reduction axis; written once in
            # the finalize step.
            out_specs=pl.BlockSpec((None, rows, 1), lambda p, l: (p, 0, 0)),
            scratch_shapes=[pltpu.VMEM((rows, 1), jnp.float32)],
        ),
        compiler_params=pltpu.CompilerParams(
            # TODO(synk): on v7x verify "parallel" actually shards the leading
            # axis across the 2 TensorCores; if not, switch that axis to
            # pltpu.CORE_PARALLEL.
            dimension_semantics=("parallel", "arbitrary"),
            vmem_limit_bytes=vmem_limit,
        ),
    )(x2, y2)

    # Tiny per-row epilogue: combine shard + fold partials, fold c1^2/L in
    # once, and use log(255) - 0.5*log(mse) instead of sqrt + divide + log.
    ssum = jnp.sum(partial, axis=0)[:, 0]            # (rows,)
    ssum = jnp.sum(ssum.reshape(R, k), axis=1)       # (R,) per original row
    mse = ssum * (c1 * c1 / L)
    psnr = c2 * (log255 - 0.5 * jnp.log(mse))
    return psnr.reshape(N, C).astype(jnp.float32)


def _psnr_ref(x, y, maxv=1.0):
    # Pure-JAX reference mirroring the PyTorch forward exactly.
    c1 = jnp.float32(np.log(255.0 / maxv))
    c2 = jnp.float32(20.0 / np.log(10.0))
    a = jnp.clip(x.astype(jnp.float32), 0.0, 1.0) * c1
    b = jnp.clip(y.astype(jnp.float32), 0.0, 1.0) * c1
    mse = jnp.mean((a - b) ** 2, axis=(2, 3))
    return c2 * jnp.log(255.0 / jnp.sqrt(mse))


if __name__ == "__main__":
    # Case 1: multi-tile path, exact division, sublane folding (R=6 -> k=4:
    # rows=24, length=256, l_tile=128 -> 2 tiles, no tail mask).
    kx, ky = jax.random.split(jax.random.PRNGKey(0))
    N, C, H, W = 2, 3, 32, 32   # module requires channels == 3
    x = jax.random.uniform(kx, (N, C, H, W), jnp.float32, minval=-0.2, maxval=1.2)
    y = jax.random.uniform(ky, (N, C, H, W), jnp.float32, minval=-0.2, maxval=1.2)
    out = psnr_rgb(x, y, maxv=1.0, l_tile=128)
    jax.block_until_ready(out)
    np.testing.assert_allclose(np.asarray(out), np.asarray(_psnr_ref(x, y)),
                               rtol=1e-5, atol=1e-5)

    # Case 2: ragged spatial size -> tail-tile masking (L=600 -> folded
    # length=150, l_tile=128 -> interior tile + masked tail tile).
    kx2, ky2 = jax.random.split(jax.random.PRNGKey(1))
    x2 = jax.random.uniform(kx2, (2, 3, 24, 25), jnp.float32, minval=-0.2, maxval=1.2)
    y2 = jax.random.uniform(ky2, (2, 3, 24, 25), jnp.float32, minval=-0.2, maxval=1.2)
    out2 = psnr_rgb(x2, y2, maxv=1.0, l_tile=128)
    jax.block_until_ready(out2)
    np.testing.assert_allclose(np.asarray(out2), np.asarray(_psnr_ref(x2, y2)),
                               rtol=1e-5, atol=1e-5)

    # Case 3: automatic tile selection (single full-row block for small L).
    x3 = x[:, :, :16, :16]
    y3 = y[:, :, :16, :16]
    out3 = psnr_rgb(x3, y3, maxv=1.0)
    jax.block_until_ready(out3)
    np.testing.assert_allclose(np.asarray(out3), np.asarray(_psnr_ref(x3, y3)),
                               rtol=1e-5, atol=1e-5)

    # Case 4: bf16 inputs stream at native width (dtype-aware tile chooser).
    xb = x.astype(jnp.bfloat16)
    yb = y.astype(jnp.bfloat16)
    out4 = psnr_rgb(xb, yb, maxv=1.0)
    jax.block_until_ready(out4)
    np.testing.assert_allclose(np.asarray(out4), np.asarray(_psnr_ref(xb, yb)),
                               rtol=1e-4, atol=1e-4)

    print("KERNEL_OK")
</pallas_src>

<mosaic_0001>
module attributes {stable_mosaic.version = 11 : i64} {
  func.func @_psnr_partial_kernel(%arg0: i32, %arg1: i32, %arg2: memref<24x128xf32, #tpu.memory_space<vmem>>, %arg3: memref<24x128xf32, #tpu.memory_space<vmem>>, %arg4: memref<1x24x1xf32, #tpu.memory_space<vmem>>, %arg5: memref<24x1xf32, #tpu.memory_space<vmem>>) attributes {dimension_semantics = [#tpu.dimension_semantics<parallel>, #tpu.dimension_semantics<arbitrary>], iteration_bounds = array<i64: 1, 2>, scalar_prefetch = 0 : i64, scratch_operands = 1 : i64, tpu.core_type = #tpu.core_type<tc>, window_params = [{transform_indices = @transform_0, window_bounds = array<i64: 24, 128>}, {transform_indices = @transform_1, window_bounds = array<i64: 24, 128>}, {transform_indices = @transform_2, window_bounds = array<i64: 1, 24, 1>}]} {
    %c0_i32 = arith.constant 0 : i32
    %0 = arith.cmpi eq, %arg1, %c0_i32 : i32
    %1 = arith.extui %0 : i1 to i32
    %c0_i32_0 = arith.constant 0 : i32
    %2 = arith.cmpi ne, %1, %c0_i32_0 : i32
    scf.if %2 {
      %cst_13 = arith.constant 0.000000e+00 : f32
      %23 = vector.broadcast %cst_13 : f32 to vector<24x1xf32>
      %c0_14 = arith.constant 0 : index
      %c0_15 = arith.constant 0 : index
      %24 = vector.load %arg5[%c0_14, %c0_15] : memref<24x1xf32, #tpu.memory_space<vmem>>, vector<24x1xf32>
      tpu.vector_store %arg5[%c0_14, %c0_15], %23 {strides = array<i32>} : memref<24x1xf32, #tpu.memory_space<vmem>>, vector<24x1xf32>,
    } else {
    }
    %c0 = arith.constant 0 : index
    %c0_1 = arith.constant 0 : index
    %3 = vector.load %arg2[%c0, %c0_1] : memref<24x128xf32, #tpu.memory_space<vmem>>, vector<24x128xf32>
    %c0_2 = arith.constant 0 : index
    %c0_3 = arith.constant 0 : index
    %4 = vector.load %arg3[%c0_2, %c0_3] : memref<24x128xf32, #tpu.memory_space<vmem>>, vector<24x128xf32>
    %cst = arith.constant 0.000000e+00 : f32
    %cst_4 = arith.constant 1.000000e+00 : f32
    %5 = vector.broadcast %cst : f32 to vector<24x128xf32>
    %6 = arith.maximumf %5, %3 : vector<24x128xf32>
    %7 = vector.broadcast %cst_4 : f32 to vector<24x128xf32>
    %8 = arith.minimumf %7, %6 : vector<24x128xf32>
    %cst_5 = arith.constant 0.000000e+00 : f32
    %cst_6 = arith.constant 1.000000e+00 : f32
    %9 = vector.broadcast %cst_5 : f32 to vector<24x128xf32>
    %10 = arith.maximumf %9, %4 : vector<24x128xf32>
    %11 = vector.broadcast %cst_6 : f32 to vector<24x128xf32>
    %12 = arith.minimumf %11, %10 : vector<24x128xf32>
    %13 = arith.subf %8, %12 : vector<24x128xf32>
    %14 = arith.mulf %13, %13 : vector<24x128xf32>
    %c0_7 = arith.constant 0 : index
    %c0_8 = arith.constant 0 : index
    %15 = vector.load %arg5[%c0_7, %c0_8] : memref<24x1xf32, #tpu.memory_space<vmem>>, vector<24x1xf32>
    %cst_9 = arith.constant dense<0.000000e+00> : vector<24xf32>
    %16 = vector.multi_reduction <add>, %14, %cst_9 [1] : vector<24x128xf32> to vector<24xf32>
    %17 = vector.shape_cast %16 : vector<24xf32> to vector<24x1xf32>
    %18 = arith.addf %15, %17 : vector<24x1xf32>
    %c0_10 = arith.constant 0 : index
    %c0_11 = arith.constant 0 : index
    %19 = vector.load %arg5[%c0_10, %c0_11] : memref<24x1xf32, #tpu.memory_space<vmem>>, vector<24x1xf32>
    tpu.vector_store %arg5[%c0_10, %c0_11], %18 {strides = array<i32>} : memref<24x1xf32, #tpu.memory_space<vmem>>, vector<24x1xf32>,
    %c1_i32 = arith.constant 1 : i32
    %20 = arith.cmpi eq, %arg1, %c1_i32 : i32
    %21 = arith.extui %20 : i1 to i32
    %c0_i32_12 = arith.constant 0 : i32
    %22 = arith.cmpi ne, %21, %c0_i32_12 : i32
    scf.if %22 {
      %c0_13 = arith.constant 0 : index
      %c0_14 = arith.constant 0 : index
      %23 = vector.load %arg5[%c0_13, %c0_14] : memref<24x1xf32, #tpu.memory_space<vmem>>, vector<24x1xf32>
      %c0_15 = arith.constant 0 : index
      %c0_16 = arith.constant 0 : index
      %c0_17 = arith.constant 0 : index
      %24 = vector.load %arg4[%c0_15, %c0_16, %c0_17] : memref<1x24x1xf32, #tpu.memory_space<vmem>>, vector<1x24x1xf32>
      %25 = vector.shape_cast %24 : vector<1x24x1xf32> to vector<24x1xf32>
      %26 = vector.shape_cast %23 : vector<24x1xf32> to vector<1x24x1xf32>
      tpu.vector_store %arg4[%c0_15, %c0_16, %c0_17], %26 {strides = array<i32>} : memref<1x24x1xf32, #tpu.memory_space<vmem>>, vector<1x24x1xf32>,
    } else {
    }
    return
  }
  func.func @transform_0(%arg0: i32, %arg1: i32) -> (i32, i32) {
    %c2_i32 = arith.constant 2 : i32
    %0 = arith.muli %arg0, %c2_i32 : i32
    %1 = arith.addi %0, %arg1 : i32
    %c0_i32 = arith.constant 0 : i32
    %c0_i32_0 = arith.constant 0 : i32
    return %c0_i32, %1 : i32, i32
  }
  func.func @transform_1(%arg0: i32, %arg1: i32) -> (i32, i32) {
    %c2_i32 = arith.constant 2 : i32
    %0 = arith.muli %arg0, %c2_i32 : i32
    %1 = arith.addi %0, %arg1 : i32
    %c0_i32 = arith.constant 0 : i32
    %c0_i32_0 = arith.constant 0 : i32
    return %c0_i32, %1 : i32, i32
  }
  func.func @transform_2(%arg0: i32, %arg1: i32) -> (i32, i32, i32) {
    %c0_i32 = arith.constant 0 : i32
    %c0_i32_0 = arith.constant 0 : i32
    %c0_i32_1 = arith.constant 0 : i32
    return %arg0, %c0_i32, %c0_i32_0 : i32, i32, i32
  }
}

</mosaic_0001>

<llo_original>
// kernel: tpu_custom_call.1
$region0: #{tpu_custom_call.1}
  #allocation0 [shape = 'u32[]', space=smem, size = 0x4, offset = 0x4, fixed_abs, tag = 'smem constant byte address 0x4 - core index']
  #allocation1 [shape = 'u32[144,128]{1,0:T(1,128)}', space=vmem, size = 0x12000, scoped, tag = 'internal scratch']
  #allocation2 [shape = 'f32[24,1]{1,0:T(8,128)}', space=vmem, size = 0x3000, scoped, tag = 'scratch operand']
  %s0 = inlined_call_operand.hbm [shape: f32[24,256], index: 0, kind: input, shape index: {}]
  %s1 = inlined_call_operand.hbm [shape: f32[24,256], index: 1, kind: input, shape index: {}]
  %s2 = inlined_call_operand.vmem [shape: f32[1,24,1], index: 2, kind: output, shape index: {}]
  %s3 = sld [smem:[#allocation0]]
  $region57: #{tpu_custom_call.1} parent=0
    _
  %s5 = ssub.s32 1, %s3
  %s6 = scalar_select 0, %s5, %s3
  $region1: #{tpu_custom_call.1} parent=0
    #allocation3 [shape = 'u8[24576]{0}', space=vmem, size = 0x6000, scoped, tag = 'input window, operand 0']
    #allocation4 [shape = 's32[2]{0}', space=sflag, size = 0x8, scoped, tag = 'scoped memory for tpu_custom_call.1']
    #allocation5 [shape = 'u8[24576]{0}', space=vmem, size = 0x6000, scoped, tag = 'input window, operand 1']
    #allocation6 [shape = 's32[2]{0}', space=sflag, size = 0x8, scoped, tag = 'scoped memory for tpu_custom_call.1']
    %7 = vsyncpa [#allocation4], 0
    %s8 = scalar_lea.sflag [#allocation4], 1
    %9 = vsyncpa %s8, 0
    %10 = vsyncpa [#allocation6], 0
    %s11 = scalar_lea.sflag [#allocation6], 1
    %12 = vsyncpa %s11, 0
    loop: start=0, step=1, limit=4
    $region2: #{tpu_custom_call.1} parent=1 // loop_pre_header
      _
    $region3: #{tpu_custom_call.1} parent=1 // loop_header
      %s14 = sphi 0, %s18
      %p15 = scmp.ge.s32.totalorder %s14, 4
      %s21 = sphi 0, %s33
      %s22 = sphi 0, %s29
      %s23 = sphi 0, %s21
      %s24 = sphi 0, %s22
      %s25 = sphi 0, %s23
      %s26 = sphi 0, %s24
      %s40 = sphi 0, %s42
      %s43 = sphi 0, %s40
      %s44 = sphi 0, %s43
      %s60 = sphi 0, %s44
      %s70 = sphi 0, %s72
      %s73 = sphi 0, %s70
      %s74 = sphi 0, %s73
      %s90 = sphi 0, %s74
      %s96 = sphi 0, %s98
      %s99 = sphi 0, %s96
      %s100 = sphi 0, %s99
      %s116 = sphi 0, %s100
    $region4: #{tpu_custom_call.1} parent=1 // loop_header_branch
      %17 = sbr.rel (%p15) target = $region8
    $region5: #{tpu_custom_call.1} parent=1 // loop_body
      %s19 = ssub.s32 %s14, 1
      %s20 = ssub.s32 %s14, 2
      %s27 = sadd.s32 1, %s22
      %p28 = scmp.ge.s32.totalorder %s27, 2
      %s29 = scalar_select %p28, 0, %s27
      %s30 = sadd.s32 1, %s21
      %s31 = scalar_select %p28, %s30, %s21
      %p32 = scmp.ge.s32.totalorder %s31, 1
      %s33 = scalar_select %p32, 0, %s31
      %s34 = smul.u32 %s21, 2
      %s35 = sadd.s32 %s34, %s22
      %s36 = smul.u32 %s33, 2
      %s37 = sadd.s32 %s36, %s29
      %s38 = ssub.s32 %s35, %s37
      %p39 = scmp.eq.s32.totalorder %s38, 0
      %s41 = sadd.s32 %s40, 1
      %s42 = scalar_select %p39, %s40, %s41
      %p45 = pneg %p39
      %p46 = scmp.eq.s32.totalorder %s14, 1
      %p47 = por %p45, %p46
      %p48 = scmp.ne.s32.totalorder %s40, %s43
      %p49 = scmp.eq.s32.totalorder %s14, 0
      %p50 = por %p48, %p49
      %p51 = scmp.ne.s32.totalorder %s40, %s43
      %p52 = scmp.eq.s32.totalorder %s19, 1
      %p53 = por %p51, %p52
      %p54 = scmp.ne.s32.totalorder %s43, %s44
      %p55 = scmp.eq.s32.totalorder %s19, 0
      %p56 = por %p54, %p55
      %p57 = scmp.ne.s32.totalorder %s43, %s44
      %p58 = scmp.eq.s32.totalorder %s20, 1
      %p59 = por %p57, %p58
      %p61 = scmp.ne.s32.totalorder %s44, %s60
      %p62 = scmp.eq.s32.totalorder %s20, 0
      %p63 = por %p61, %p62
      %s64 = smul.u32 %s21, 2
      %s65 = sadd.s32 %s64, %s22
      %s66 = smul.u32 %s33, 2
      %s67 = sadd.s32 %s66, %s29
      %s68 = ssub.s32 %s65, %s67
      %p69 = scmp.eq.s32.totalorder %s68, 0
      %s71 = sadd.s32 %s70, 1
      %s72 = scalar_select %p69, %s70, %s71
      %p75 = pneg %p69
      %p76 = scmp.eq.s32.totalorder %s14, 1
      %p77 = por %p75, %p76
      %p78 = scmp.ne.s32.totalorder %s70, %s73
      %p79 = scmp.eq.s32.totalorder %s14, 0
      %p80 = por %p78, %p79
      %p81 = scmp.ne.s32.totalorder %s70, %s73
      %p82 = scmp.eq.s32.totalorder %s19, 1
      %p83 = por %p81, %p82
      %p84 = scmp.ne.s32.totalorder %s73, %s74
      %p85 = scmp.eq.s32.totalorder %s19, 0
      %p86 = por %p84, %p85
      %p87 = scmp.ne.s32.totalorder %s73, %s74
      %p88 = scmp.eq.s32.totalorder %s20, 1
      %p89 = por %p87, %p88
      %p91 = scmp.ne.s32.totalorder %s74, %s90
      %p92 = scmp.eq.s32.totalorder %s20, 0
      %p93 = por %p91, %p92
      %s94 = ssub.s32 %s21, %s33
      %p95 = scmp.eq.s32.totalorder %s94, 0
      %s97 = sadd.s32 %s96, 1
      %s98 = scalar_select %p95, %s96, %s97
      %p101 = pneg %p95
      %p102 = scmp.eq.s32.totalorder %s14, 1
      %p103 = por %p101, %p102
      %p104 = scmp.ne.s32.totalorder %s96, %s99
      %p105 = scmp.eq.s32.totalorder %s14, 0
      %p106 = por %p104, %p105
      %p107 = scmp.ne.s32.totalorder %s96, %s99
      %p108 = scmp.eq.s32.totalorder %s19, 1
      %p109 = por %p107, %p108
      %p110 = scmp.ne.s32.totalorder %s99, %s100
      %p111 = scmp.eq.s32.totalorder %s19, 0
      %p112 = por %p110, %p111
      %p113 = scmp.ne.s32.totalorder %s99, %s100
      %p114 = scmp.eq.s32.totalorder %s20, 1
      %p115 = por %p113, %p114
      %p117 = scmp.ne.s32.totalorder %s100, %s116
      %p118 = scmp.eq.s32.totalorder %s20, 0
      %p119 = por %p117, %p118
      %p120 = scmp.le.s32.totalorder 1, %s14
      %p121 = scmp.lt.s32.totalorder %s14, 3
      %p122 = pnand %p120, %p121
      %p123 = pneg %p122
      // Predicated region
      $region9: #{tpu_custom_call.1} parent=5 // pred_check
        _
      $region10: #{tpu_custom_call.1} parent=5 // pred_check_branch
        %125 = sbr.rel (%p122) target = $region12
      $region11: #{tpu_custom_call.1} parent=5 // pred_region
        %s126 = ssub.s32 %s14, 1
      $region12: #{tpu_custom_call.1} parent=5 // pred_fallthru
        _
      %p127 = scmp.lt.s32.totalorder %s14, 2
      // Predicated region
      $region13: #{tpu_custom_call.1} parent=5 // pred_check
        %p128 = pneg %p127
      $region14: #{tpu_custom_call.1} parent=5 // pred_check_branch
        %130 = sbr.rel (%p128) target = $region16
      $region15: #{tpu_custom_call.1} parent=5 // pred_region
        // Predicated region
        $region17: #{tpu_custom_call.1} parent=15 // pred_check
          %p131 = pneg %p50
        $region18: #{tpu_custom_call.1} parent=15 // pred_check_branch
          %133 = sbr.rel (%p131) target = $region20
        $region19: #{tpu_custom_call.1} parent=15 // pred_region
          %s134 = sand.u32 %s40, 1
          %s135 = scalar_lea.sflag [#allocation4], %s134
          %s136 = sand.u32 %s40, 1
          %s137 = smul.addr %s136, 24
          %s138 = scalar_lea.vmem [#allocation3], %s137
          %s139 = smul.u32 %s21, 2
          %s140 = sadd.s32 %s139, %s22
          %s142 = ssub.s32 384, 384
          %143 = vsyncadd %s135, %s142
          %s144 = smul.addr %s140, 128
          %s145 = scalar_lea.hbm %s0, %s144
          %s146 = sshll.u32 %s138, 4
          %s147 = int_to_ptr.vmem [resolvable:$true] %s146
          %152 = dma.hbm_to_vmem [thread:$0]  %s145, 384, %s147, %s135, 256, 128, 8
        $region20: #{tpu_custom_call.1} parent=15 // pred_fallthru
          _
        // Predicated region
        $region21: #{tpu_custom_call.1} parent=15 // pred_check
          %p153 = pneg %p80
        $region22: #{tpu_custom_call.1} parent=15 // pred_check_branch
          %155 = sbr.rel (%p153) target = $region24
        $region23: #{tpu_custom_call.1} parent=15 // pred_region
          %s156 = sand.u32 %s70, 1
          %s157 = scalar_lea.sflag [#allocation6], %s156
          %s158 = sand.u32 %s70, 1
          %s159 = smul.addr %s158, 24
          %s160 = scalar_lea.vmem [#allocation5], %s159
          %s161 = smul.u32 %s21, 2
          %s162 = sadd.s32 %s161, %s22
          %s164 = ssub.s32 384, 384
          %165 = vsyncadd %s157, %s164
          %s166 = smul.addr %s162, 128
          %s167 = scalar_lea.hbm %s1, %s166
          %s168 = sshll.u32 %s160, 4
          %s169 = int_to_ptr.vmem [resolvable:$true] %s168
          %174 = dma.hbm_to_vmem [thread:$0]  %s167, 384, %s169, %s157, 256, 128, 8
        $region24: #{tpu_custom_call.1} parent=15 // pred_fallthru
          _
      $region16: #{tpu_custom_call.1} parent=5 // pred_fallthru
        _
      %p175 = scmp.le.s32.totalorder 1, %s14
      %p176 = scmp.lt.s32.totalorder %s14, 3
      %p177 = pnand %p175, %p176
      %p178 = pneg %p177
      // Predicated region
      $region25: #{tpu_custom_call.1} parent=5 // pred_check
        _
      $region26: #{tpu_custom_call.1} parent=5 // pred_check_branch
        %180 = sbr.rel (%p177) target = $region28
      $region27: #{tpu_custom_call.1} parent=5 // pred_region
        %s181 = ssub.s32 %s14, 1
        %s182 = sand.u32 %s43, 1
        %s183 = scalar_lea.sflag [#allocation4], %s182
        %s184 = sand.u32 %s43, 1
        %s185 = smul.addr %s184, 24
        %s186 = scalar_lea.vmem [#allocation3], %s185
        // Predicated region
        $region29: #{tpu_custom_call.1} parent=27 // pred_check
          %p187 = pneg %p56
        $region30: #{tpu_custom_call.1} parent=27 // pred_check_branch
          %189 = sbr.rel (%p187) target = $region32
        $region31: #{tpu_custom_call.1} parent=27 // pred_region
          %190 = dma.done %s183, 384
        $region32: #{tpu_custom_call.1} parent=27 // pred_fallthru
          _
        %s191 = sand.u32 %s73, 1
        %s192 = scalar_lea.sflag [#allocation6], %s191
        %s193 = sand.u32 %s73, 1
        %s194 = smul.addr %s193, 24
        %s195 = scalar_lea.vmem [#allocation5], %s194
        // Predicated region
        $region33: #{tpu_custom_call.1} parent=27 // pred_check
          %p196 = pneg %p86
        $region34: #{tpu_custom_call.1} parent=27 // pred_check_branch
          %198 = sbr.rel (%p196) target = $region36
        $region35: #{tpu_custom_call.1} parent=27 // pred_region
          %199 = dma.done %s192, 384
        $region36: #{tpu_custom_call.1} parent=27 // pred_fallthru
          _
        %s200 = sand.u32 %s43, 1
        %s201 = scalar_lea.sflag [#allocation4], %s200
        %s202 = sand.u32 %s43, 1
        %s203 = smul.addr %s202, 24
        %s204 = scalar_lea.vmem [#allocation3], %s203
        %p205 = pneg %p56
        %p206 = pneg %p53
        %s207 = sand.u32 %s73, 1
        %s208 = scalar_lea.sflag [#allocation6], %s207
        %s209 = sand.u32 %s73, 1
        %s210 = smul.addr %s209, 24
        %s211 = scalar_lea.vmem [#allocation5], %s210
        %p212 = pneg %p86
        %p213 = pneg %p83
        %p214 = pneg %p112
        %p215 = pneg %p109
        %p216 = scmp.lt.s32.totalorder %s23, 0
        %s217 = scalar_select %p216, %s23, 0
        %s218 = smul.addr %s217, 3
        %s219 = smul.addr %s218, 8
        %s220 = scalar_lea.vmem %s2, %s219
        %s221 = smul.u32 %s23, 2
        %s222 = sadd.s32 %s221, %s24
        %s223 = smul.u32 %s23, 2
        %s224 = sadd.s32 %s223, %s24
        %p225 = scmp.lt.s32.totalorder %s23, 0
        %s226 = scalar_select %p225, %s23, 0
        %s227 = smul.addr %s226, 3
        %s228 = smul.addr %s227, 8
        %s229 = scalar_lea.vmem %s2, %s228
        %p230 = scmp.eq.s32.totalorder %s24, 0
        // Predicated region
        $region37: #{tpu_custom_call.1} parent=27 // pred_check
          %p231 = pneg %p230
        $region38: #{tpu_custom_call.1} parent=27 // pred_check_branch
          %233 = sbr.rel (%p231) target = $region40
        $region39: #{tpu_custom_call.1} parent=27 // pred_region
          %vm234 = vcmask 7168
          %235 = vst.msk [vmem:[#allocation2] sm:$0xff] %vm234, 0.0
          %236 = vst.msk [vmem:[#allocation2 + $0x8] sm:$0xff] %vm234, 0.0
          %237 = vst.msk [vmem:[#allocation2 + $0x10] sm:$0xff] %vm234, 0.0
        $region40: #{tpu_custom_call.1} parent=27 // pred_fallthru
          _
        %v238 = vld [vmem:[%s186] sm:$0xff]
        %v239 = vld [vmem:[%s186 + $0x8] sm:$0xff]
        %v240 = vld [vmem:[%s186 + $0x10] sm:$0xff]
        %v241 = vld [vmem:[%s195] sm:$0xff]
        %v242 = vld [vmem:[%s195 + $0x8] sm:$0xff]
        %v243 = vld [vmem:[%s195 + $0x10] sm:$0xff]
        %v244 = vmax.f32 %v238, 0.0
        %v245 = vmax.f32 %v239, 0.0
        %v246 = vmax.f32 %v240, 0.0
        %v247 = vmin.f32 %v244, 1.0
        %v248 = vmin.f32 %v245, 1.0
        %v249 = vmin.f32 %v246, 1.0
        %v250 = vmax.f32 %v241, 0.0
        %v251 = vmax.f32 %v242, 0.0
        %v252 = vmax.f32 %v243, 0.0
        %v253 = vmin.f32 %v250, 1.0
        %v254 = vmin.f32 %v251, 1.0
        %v255 = vmin.f32 %v252, 1.0
        %v256 = vsub.f32 %v247, %v253
        %v257 = vsub.f32 %v248, %v254
        %v258 = vsub.f32 %v249, %v255
        %v259 = vmul.f32 %v256, %v256
        %v260 = vmul.f32 %v257, %v257
        %v261 = vmul.f32 %v258, %v258
        %v262 = vld [vmem:[#allocation2] sm:$0xff]
        %v263 = vld [vmem:[#allocation2 + $0x8] sm:$0xff]
        %v264 = vld [vmem:[#allocation2 + $0x10] sm:$0xff]
        %265 = vadd.xlane.f32.xlu0 %v259
        %v266 = vpop.xlane.xlu0 %265
        %267 = vadd.xlane.f32.xlu0 %v260
        %v268 = vpop.xlane.xlu0 %267
        %269 = vadd.xlane.f32.xlu0 %v261
        %v270 = vpop.xlane.xlu0 %269
        %v271 = vadd.f32 %v262, %v266
        %v272 = vadd.f32 %v263, %v268
        %v273 = vadd.f32 %v264, %v270
        %vm274 = vcmask 7168
        %275 = vst.msk [vmem:[#allocation2] sm:$0xff] %vm274, %v271
        %276 = vst.msk [vmem:[#allocation2 + $0x8] sm:$0xff] %vm274, %v272
        %277 = vst.msk [vmem:[#allocation2 + $0x10] sm:$0xff] %vm274, %v273
        %p278 = scmp.eq.s32.totalorder %s24, 1
        // Predicated region
        $region41: #{tpu_custom_call.1} parent=27 // pred_check
          %p279 = pneg %p278
        $region42: #{tpu_custom_call.1} parent=27 // pred_check_branch
          %281 = sbr.rel (%p279) target = $region44
        $region43: #{tpu_custom_call.1} parent=27 // pred_region
          %v282 = vld [vmem:[#allocation2] sm:$0xff]
          %v283 = vld [vmem:[#allocation2 + $0x8] sm:$0xff]
          %v284 = vld [vmem:[#allocation2 + $0x10] sm:$0xff]
          %285 = vst.msk [vmem:[%s229] sm:$0xff] %vm274, %v282
          %286 = vst.msk [vmem:[%s229 + $0x8] sm:$0xff] %vm274, %v283
          %287 = vst.msk [vmem:[%s229 + $0x10] sm:$0xff] %vm274, %v284
        $region44: #{tpu_custom_call.1} parent=27 // pred_fallthru
          _
        %p288 = scmp.lt.s32.totalorder %s23, 0
        %s289 = scalar_select %p288, %s23, 0
        %s290 = smul.addr %s289, 3
        %s291 = smul.addr %s290, 8
        %s292 = scalar_lea.vmem %s2, %s291
        // Predicated region
        $region45: #{tpu_custom_call.1} parent=27 // pred_check
          %p293 = pneg %p109
        $region46: #{tpu_custom_call.1} parent=27 // pred_check_branch
          %295 = sbr.rel (%p293) target = $region48
        $region47: #{tpu_custom_call.1} parent=27 // pred_region
          _
        $region48: #{tpu_custom_call.1} parent=27 // pred_fallthru
          _
        // Predicated region
        $region49: #{tpu_custom_call.1} parent=27 // pred_check
          %p296 = pneg %p109
        $region50: #{tpu_custom_call.1} parent=27 // pred_check_branch
          %298 = sbr.rel (%p296) target = $region52
        $region51: #{tpu_custom_call.1} parent=27 // pred_region
          %p299 = scmp.lt.s32.totalorder %s23, 0
          %s300 = scalar_select %p299, %s23, 0
          %s301 = smul.addr %s300, 3
          %s302 = smul.addr %s301, 8
          %s303 = scalar_lea.vmem %s2, %s302
        $region52: #{tpu_custom_call.1} parent=27 // pred_fallthru
          _
      $region28: #{tpu_custom_call.1} parent=5 // pred_fallthru
        _
      %p304 = scmp.le.s32.totalorder 2, %s14
      // Predicated region
      $region53: #{tpu_custom_call.1} parent=5 // pred_check
        %p305 = pneg %p304
      $region54: #{tpu_custom_call.1} parent=5 // pred_check_branch
        %307 = sbr.rel (%p305) target = $region56
      $region55: #{tpu_custom_call.1} parent=5 // pred_region
        %s308 = ssub.s32 %s14, 2
      $region56: #{tpu_custom_call.1} parent=5 // pred_fallthru
        _
    $region6: #{tpu_custom_call.1} parent=1 // loop_footer
      %s18 = sadd.s32 1, %s14
    $region7: #{tpu_custom_call.1} parent=1 // loop_footer_branch
      %13 = sbr.rel target = $region3
    $region8: #{tpu_custom_call.1} parent=1 // loop_exit
      _
    %309 = vsyncpa [#allocation4], 1
    %s310 = scalar_lea.sflag [#allocation4], 1
    %311 = vsyncpa %s310, 1
    %312 = vsyncpa [#allocation6], 1
    %s313 = scalar_lea.sflag [#allocation6], 1
    %314 = vsyncpa %s313, 1

</llo_original>
